<compile_context>
chip_gen: v5e
topology: v5e:2x2
jax: 0.10.0
libtpu: 0.0.40
codegen_flags: <defaults>
</compile_context>

<pallas_src>
import jax
import jax.numpy as jnp
from jax.experimental import pallas as pl
from jax.experimental.pallas import tpu as pltpu


def _mlp_kernel(x_ref, w1_ref, b1_ref, w2_ref, b2_ref, w3_ref, b3_ref, o_ref):
    # Feature-major: x_ref is (1, TN) with nodes on the lane axis.
    x = x_ref[...]                                   # (1, TN)

    # Layer 1: Linear(1 -> 64).  K=1 matmul is a degenerate MXU op, so do it
    # as a broadcast outer product + bias on the VPU.
    h1 = w1_ref[...] * x + b1_ref[...]               # (64,1)*(1,TN) -> (64,TN)
    h1 = jnp.maximum(h1, 0.0)

    # Layer 2: Linear(64 -> 32) on the MXU: (32,64) @ (64,TN).
    h2 = jnp.dot(w2_ref[...], h1, preferred_element_type=jnp.float32) + b2_ref[...]
    h2 = jnp.maximum(h2, 0.0)

    # Layer 3: Linear(32 -> 2): (2,32) @ (32,TN); output stays lane-dense.
    o_ref[...] = (
        jnp.dot(w3_ref[...], h2, preferred_element_type=jnp.float32) + b3_ref[...]
    )


def _round_up(x, m):
    return ((x + m - 1) // m) * m


def graph_nn_forward(g_signal, params, *, tile_n=None):
    """GraphNN forward: per-node MLP 1->64->32->2 on g_signal (N, 1) -> (N, 2).

    edge_index is unused by the reference forward pass, so it is not taken.
    """
    w1, b1, w2, b2, w3, b3 = params  # (64,1),(64,1),(32,64),(32,1),(2,32),(2,1)
    n, f_in = g_signal.shape
    assert f_in == 1

    if tile_n is None:
        tile_n = min(8192, _round_up(n, 128))
    tile_n = max(128, _round_up(tile_n, 128))

    n_pad = _round_up(n, tile_n)
    grid = (n_pad // tile_n,)

    # Feature-major input: (N, 1) -> (1, N_pad); nodes land on the lane axis.
    # (Reshape of an (N,1) array is just a relabel, not a real transpose.)
    x_fm = jnp.pad(g_signal, ((0, n_pad - n), (0, 0))).reshape(1, n_pad)

    def full(arr):
        return pl.BlockSpec(arr.shape, lambda i: (0, 0))

    flops = 2 * n * (1 * 64 + 64 * 32 + 32 * 2)
    bytes_accessed = 4 * n * (1 + 2) + sum(4 * int(p.size) for p in params)

    out_fm = pl.pallas_call(
        _mlp_kernel,
        out_shape=jax.ShapeDtypeStruct((2, n_pad), jnp.float32),
        grid_spec=pltpu.PrefetchScalarGridSpec(
            num_scalar_prefetch=0,
            grid=grid,
            in_specs=[
                pl.BlockSpec((1, tile_n), lambda i: (0, i)),   # node signals
                full(w1), full(b1),
                full(w2), full(b2),
                full(w3), full(b3),
            ],
            out_specs=pl.BlockSpec((2, tile_n), lambda i: (0, i)),
        ),
        compiler_params=pltpu.CompilerParams(
            dimension_semantics=("parallel",)),
        cost_estimate=pl.CostEstimate(
            flops=flops, transcendentals=0, bytes_accessed=bytes_accessed),
    )(x_fm, w1, b1, w2, b2, w3, b3)

    # Back to node-major (N, 2), dropping padded rows.
    return out_fm[:, :n].T


def init_params(key):
    """Deterministic synthetic parameters with PyTorch Linear layout (out, in)."""
    k1, k2, k3, k4, k5, k6 = jax.random.split(key, 6)
    w1 = jax.random.normal(k1, (64, 1), jnp.float32) * 0.5
    b1 = jax.random.normal(k2, (64, 1), jnp.float32) * 0.1
    w2 = jax.random.normal(k3, (32, 64), jnp.float32) * 0.1
    b2 = jax.random.normal(k4, (32, 1), jnp.float32) * 0.1
    w3 = jax.random.normal(k5, (2, 32), jnp.float32) * 0.1
    b3 = jax.random.normal(k6, (2, 1), jnp.float32) * 0.1
    return (w1, b1, w2, b2, w3, b3)


def reference_forward(g_signal, params):
    # Node-major reference, matching PyTorch's x @ W.T + b.
    w1, b1, w2, b2, w3, b3 = params
    h1 = jnp.maximum(g_signal @ w1.T + b1.T, 0.0)
    h2 = jnp.maximum(h1 @ w2.T + b2.T, 0.0)
    return h2 @ w3.T + b3.T


if __name__ == "__main__":
    key = jax.random.PRNGKey(0)
    kp, kx, ke = jax.random.split(key, 3)

    # Small graph; N deliberately NOT a multiple of 128 to exercise padding.
    N = 200
    params = init_params(kp)
    g_signal = jax.random.normal(kx, (N, 1), jnp.float32)
    # edge_index exists in the PyTorch signature but is unused by forward().
    edge_index = jax.random.randint(ke, (2, 400), 0, N)  # unused

    out = graph_nn_forward(g_signal, params)
    out = jax.block_until_ready(out)

    ref = reference_forward(g_signal, params)
    assert out.shape == (N, 2)
    assert jnp.allclose(out, ref, atol=1e-5, rtol=1e-5)

    print("KERNEL_OK")
</pallas_src>

<mosaic_0001>
module attributes {stable_mosaic.version = 11 : i64} {
  func.func @_mlp_kernel(%arg0: i32, %arg1: memref<1x256xf32, #tpu.memory_space<vmem>>, %arg2: memref<64x1xf32, #tpu.memory_space<vmem>>, %arg3: memref<64x1xf32, #tpu.memory_space<vmem>>, %arg4: memref<32x64xf32, #tpu.memory_space<vmem>>, %arg5: memref<32x1xf32, #tpu.memory_space<vmem>>, %arg6: memref<2x32xf32, #tpu.memory_space<vmem>>, %arg7: memref<2x1xf32, #tpu.memory_space<vmem>>, %arg8: memref<2x256xf32, #tpu.memory_space<vmem>>) attributes {dimension_semantics = [#tpu.dimension_semantics<parallel>], iteration_bounds = array<i64: 1>, scalar_prefetch = 0 : i64, scratch_operands = 0 : i64, tpu.core_type = #tpu.core_type<tc>, window_params = [{transform_indices = @transform_0, window_bounds = array<i64: 1, 256>}, {pipeline_mode = #tpu.pipeline_mode<synchronous>, transform_indices = @transform_1, window_bounds = array<i64: 64, 1>}, {pipeline_mode = #tpu.pipeline_mode<synchronous>, transform_indices = @transform_2, window_bounds = array<i64: 64, 1>}, {pipeline_mode = #tpu.pipeline_mode<synchronous>, transform_indices = @transform_3, window_bounds = array<i64: 32, 64>}, {pipeline_mode = #tpu.pipeline_mode<synchronous>, transform_indices = @transform_4, window_bounds = array<i64: 32, 1>}, {pipeline_mode = #tpu.pipeline_mode<synchronous>, transform_indices = @transform_5, window_bounds = array<i64: 2, 32>}, {pipeline_mode = #tpu.pipeline_mode<synchronous>, transform_indices = @transform_6, window_bounds = array<i64: 2, 1>}, {transform_indices = @transform_7, window_bounds = array<i64: 2, 256>}]} {
    %c0 = arith.constant 0 : index
    %c0_0 = arith.constant 0 : index
    %0 = vector.load %arg1[%c0, %c0_0] : memref<1x256xf32, #tpu.memory_space<vmem>>, vector<1x256xf32>
    %c0_1 = arith.constant 0 : index
    %c0_2 = arith.constant 0 : index
    %1 = vector.load %arg2[%c0_1, %c0_2] : memref<64x1xf32, #tpu.memory_space<vmem>>, vector<64x1xf32>
    %2 = vector.broadcast %1 : vector<64x1xf32> to vector<64x256xf32>
    %3 = vector.broadcast %0 : vector<1x256xf32> to vector<64x256xf32>
    %4 = arith.mulf %2, %3 : vector<64x256xf32>
    %c0_3 = arith.constant 0 : index
    %c0_4 = arith.constant 0 : index
    %5 = vector.load %arg3[%c0_3, %c0_4] : memref<64x1xf32, #tpu.memory_space<vmem>>, vector<64x1xf32>
    %6 = vector.broadcast %5 : vector<64x1xf32> to vector<64x256xf32>
    %7 = arith.addf %4, %6 : vector<64x256xf32>
    %cst = arith.constant 0.000000e+00 : f32
    %8 = vector.broadcast %cst : f32 to vector<64x256xf32>
    %9 = arith.maximumf %7, %8 : vector<64x256xf32>
    %c0_5 = arith.constant 0 : index
    %c0_6 = arith.constant 0 : index
    %10 = vector.load %arg4[%c0_5, %c0_6] : memref<32x64xf32, #tpu.memory_space<vmem>>, vector<32x64xf32>
    %cst_7 = arith.constant dense<0.000000e+00> : vector<32x256xf32>
    %11 = tpu.matmul %10, %9, %cst_7 {dimension_numbers = #tpu.dot_dimension_numbers<[1], [0], [0], [1], [0, 0, 1, 1], [], []>} : vector<32x64xf32>, vector<64x256xf32>, vector<32x256xf32> -> vector<32x256xf32>
    %c0_8 = arith.constant 0 : index
    %c0_9 = arith.constant 0 : index
    %12 = vector.load %arg5[%c0_8, %c0_9] : memref<32x1xf32, #tpu.memory_space<vmem>>, vector<32x1xf32>
    %13 = vector.broadcast %12 : vector<32x1xf32> to vector<32x256xf32>
    %14 = arith.addf %11, %13 : vector<32x256xf32>
    %cst_10 = arith.constant 0.000000e+00 : f32
    %15 = vector.broadcast %cst_10 : f32 to vector<32x256xf32>
    %16 = arith.maximumf %14, %15 : vector<32x256xf32>
    %c0_11 = arith.constant 0 : index
    %c0_12 = arith.constant 0 : index
    %17 = vector.load %arg6[%c0_11, %c0_12] : memref<2x32xf32, #tpu.memory_space<vmem>>, vector<2x32xf32>
    %cst_13 = arith.constant dense<0.000000e+00> : vector<2x256xf32>
    %18 = tpu.matmul %17, %16, %cst_13 {dimension_numbers = #tpu.dot_dimension_numbers<[1], [0], [0], [1], [0, 0, 1, 1], [], []>} : vector<2x32xf32>, vector<32x256xf32>, vector<2x256xf32> -> vector<2x256xf32>
    %c0_14 = arith.constant 0 : index
    %c0_15 = arith.constant 0 : index
    %19 = vector.load %arg7[%c0_14, %c0_15] : memref<2x1xf32, #tpu.memory_space<vmem>>, vector<2x1xf32>
    %20 = vector.broadcast %19 : vector<2x1xf32> to vector<2x256xf32>
    %21 = arith.addf %18, %20 : vector<2x256xf32>
    %c0_16 = arith.constant 0 : index
    %c0_17 = arith.constant 0 : index
    %22 = vector.load %arg8[%c0_16, %c0_17] : memref<2x256xf32, #tpu.memory_space<vmem>>, vector<2x256xf32>
    tpu.vector_store %arg8[%c0_16, %c0_17], %21 {strides = array<i32>} : memref<2x256xf32, #tpu.memory_space<vmem>>, vector<2x256xf32>,
    return
  }
  func.func @transform_0(%arg0: i32) -> (i32, i32) {
    %c0_i32 = arith.constant 0 : i32
    %c0_i32_0 = arith.constant 0 : i32
    return %c0_i32, %arg0 : i32, i32
  }
  func.func @transform_1(%arg0: i32) -> (i32, i32) {
    %c0_i32 = arith.constant 0 : i32
    %c0_i32_0 = arith.constant 0 : i32
    %c0_i32_1 = arith.constant 0 : i32
    return %c0_i32, %c0_i32_0 : i32, i32
  }
  func.func @transform_2(%arg0: i32) -> (i32, i32) {
    %c0_i32 = arith.constant 0 : i32
    %c0_i32_0 = arith.constant 0 : i32
    %c0_i32_1 = arith.constant 0 : i32
    return %c0_i32, %c0_i32_0 : i32, i32
  }
  func.func @transform_3(%arg0: i32) -> (i32, i32) {
    %c0_i32 = arith.constant 0 : i32
    %c0_i32_0 = arith.constant 0 : i32
    %c0_i32_1 = arith.constant 0 : i32
    return %c0_i32, %c0_i32_0 : i32, i32
  }
  func.func @transform_4(%arg0: i32) -> (i32, i32) {
    %c0_i32 = arith.constant 0 : i32
    %c0_i32_0 = arith.constant 0 : i32
    %c0_i32_1 = arith.constant 0 : i32
    return %c0_i32, %c0_i32_0 : i32, i32
  }
  func.func @transform_5(%arg0: i32) -> (i32, i32) {
    %c0_i32 = arith.constant 0 : i32
    %c0_i32_0 = arith.constant 0 : i32
    %c0_i32_1 = arith.constant 0 : i32
    return %c0_i32, %c0_i32_0 : i32, i32
  }
  func.func @transform_6(%arg0: i32) -> (i32, i32) {
    %c0_i32 = arith.constant 0 : i32
    %c0_i32_0 = arith.constant 0 : i32
    %c0_i32_1 = arith.constant 0 : i32
    return %c0_i32, %c0_i32_0 : i32, i32
  }
  func.func @transform_7(%arg0: i32) -> (i32, i32) {
    %c0_i32 = arith.constant 0 : i32
    %c0_i32_0 = arith.constant 0 : i32
    return %c0_i32, %arg0 : i32, i32
  }
}

</mosaic_0001>

<llo_original>
// kernel: tpu_custom_call.1
$region0: #{tpu_custom_call.1}
  #allocation0 [shape = 'u32[]', space=smem, size = 0x4, offset = 0x4, fixed_abs, tag = 'smem constant byte address 0x4 - core index']
  #allocation1 [shape = 'u32[72,128]{1,0:T(1,128)}', space=vmem, size = 0x9000, scoped, tag = 'internal scratch']
  %s0 = inlined_call_operand.vmem [shape: f32[1,256], index: 0, kind: input, shape index: {}]
  %s1 = inlined_call_operand.vmem [shape: f32[64,1], index: 1, kind: input, shape index: {}]
  %s2 = inlined_call_operand.vmem [shape: f32[64,1], index: 2, kind: input, shape index: {}]
  %s3 = inlined_call_operand.vmem [shape: f32[32,64], index: 3, kind: input, shape index: {}]
  %s4 = inlined_call_operand.vmem [shape: f32[32,1], index: 4, kind: input, shape index: {}]
  %s5 = inlined_call_operand.vmem [shape: f32[2,32], index: 5, kind: input, shape index: {}]
  %s6 = inlined_call_operand.vmem [shape: f32[2,1], index: 6, kind: input, shape index: {}]
  %s7 = inlined_call_operand.hbm [shape: f32[2,256], index: 7, kind: output, shape index: {}]
  %s8 = sld [smem:[#allocation0]]
  $region38: #{tpu_custom_call.1} parent=0
    _
  %s10 = ssub.s32 1, %s8
  %s11 = scalar_select 0, %s10, %s8
  $region1: #{tpu_custom_call.1} parent=0
    #allocation2 [shape = 'u8[2048]{0}', space=vmem, size = 0x800, scoped, tag = 'output window, operand 0, single buffered']
    #allocation3 [shape = 's32[1]{0}', space=sflag, size = 0x4, scoped, tag = 'scoped memory for tpu_custom_call.1']
    %12 = vsyncpa [#allocation3], 0
    // Predicated region
    $region2: #{tpu_custom_call.1} parent=1 // pred_check
      _
    $region3: #{tpu_custom_call.1} parent=1 // pred_check_branch
      %14 = sbr.rel (0) target = $region5
    $region4: #{tpu_custom_call.1} parent=1 // pred_region
      _
    $region5: #{tpu_custom_call.1} parent=1 // pred_fallthru
      _
    // Predicated region
    $region6: #{tpu_custom_call.1} parent=1 // pred_check
      _
    $region7: #{tpu_custom_call.1} parent=1 // pred_check_branch
      %16 = sbr.rel (0) target = $region9
    $region8: #{tpu_custom_call.1} parent=1 // pred_region
      _
    $region9: #{tpu_custom_call.1} parent=1 // pred_fallthru
      _
    // Predicated region
    $region10: #{tpu_custom_call.1} parent=1 // pred_check
      _
    $region11: #{tpu_custom_call.1} parent=1 // pred_check_branch
      %18 = sbr.rel (0) target = $region13
    $region12: #{tpu_custom_call.1} parent=1 // pred_region
      _
    $region13: #{tpu_custom_call.1} parent=1 // pred_fallthru
      _
    // Predicated region
    $region14: #{tpu_custom_call.1} parent=1 // pred_check
      _
    $region15: #{tpu_custom_call.1} parent=1 // pred_check_branch
      %20 = sbr.rel (0) target = $region17
    $region16: #{tpu_custom_call.1} parent=1 // pred_region
      _
    $region17: #{tpu_custom_call.1} parent=1 // pred_fallthru
      _
    // Predicated region
    $region18: #{tpu_custom_call.1} parent=1 // pred_check
      _
    $region19: #{tpu_custom_call.1} parent=1 // pred_check_branch
      %22 = sbr.rel (0) target = $region21
    $region20: #{tpu_custom_call.1} parent=1 // pred_region
      _
    $region21: #{tpu_custom_call.1} parent=1 // pred_fallthru
      _
    // Predicated region
    $region22: #{tpu_custom_call.1} parent=1 // pred_check
      _
    $region23: #{tpu_custom_call.1} parent=1 // pred_check_branch
      %24 = sbr.rel (0) target = $region25
    $region24: #{tpu_custom_call.1} parent=1 // pred_region
      _
    $region25: #{tpu_custom_call.1} parent=1 // pred_fallthru
      _
    // Predicated region
    $region26: #{tpu_custom_call.1} parent=1 // pred_check
      _
    $region27: #{tpu_custom_call.1} parent=1 // pred_check_branch
      %26 = sbr.rel (0) target = $region29
    $region28: #{tpu_custom_call.1} parent=1 // pred_region
      _
    $region29: #{tpu_custom_call.1} parent=1 // pred_fallthru
      _
    %v27 = vld [vmem:[%s0] sm:$0x3]
    %v28 = vld [vmem:[%s1] sm:$0xff]
    %v29 = vld [vmem:[%s1 + $0x8] sm:$0xff]
    %v30 = vld [vmem:[%s1 + $0x10] sm:$0xff]
    %v31 = vld [vmem:[%s1 + $0x18] sm:$0xff]
    %v32 = vld [vmem:[%s1 + $0x20] sm:$0xff]
    %v33 = vld [vmem:[%s1 + $0x28] sm:$0xff]
    %v34 = vld [vmem:[%s1 + $0x30] sm:$0xff]
    %v35 = vld [vmem:[%s1 + $0x38] sm:$0xff]
    %37 = vset.pattern.permute.xlu0 0
    %38 = vperm.xlu0 %37, %v28
    %v39 = vpop.permute.xlu0 %38
    %42 = vset.pattern.permute.xlu0 0
    %43 = vperm.xlu0 %42, %v29
    %v44 = vpop.permute.xlu0 %43
    %47 = vset.pattern.permute.xlu0 0
    %48 = vperm.xlu0 %47, %v30
    %v49 = vpop.permute.xlu0 %48
    %52 = vset.pattern.permute.xlu0 0
    %53 = vperm.xlu0 %52, %v31
    %v54 = vpop.permute.xlu0 %53
    %57 = vset.pattern.permute.xlu0 0
    %58 = vperm.xlu0 %57, %v32
    %v59 = vpop.permute.xlu0 %58
    %62 = vset.pattern.permute.xlu0 0
    %63 = vperm.xlu0 %62, %v33
    %v64 = vpop.permute.xlu0 %63
    %67 = vset.pattern.permute.xlu0 0
    %68 = vperm.xlu0 %67, %v34
    %v69 = vpop.permute.xlu0 %68
    %72 = vset.pattern.permute.xlu0 0
    %73 = vperm.xlu0 %72, %v35
    %v74 = vpop.permute.xlu0 %73
    %v77 = vperm.slane %v27, 0
    %v78 = vperm.slane %v27, 1
    %v81 = vmul.f32 %v39, %v77
    %v82 = vmul.f32 %v39, %v78
    %v83 = vmul.f32 %v44, %v77
    %v84 = vmul.f32 %v44, %v78
    %v85 = vmul.f32 %v49, %v77
    %v86 = vmul.f32 %v49, %v78
    %v87 = vmul.f32 %v54, %v77
    %v88 = vmul.f32 %v54, %v78
    %v89 = vmul.f32 %v59, %v77
    %v90 = vmul.f32 %v59, %v78
    %v91 = vmul.f32 %v64, %v77
    %v92 = vmul.f32 %v64, %v78
    %v93 = vmul.f32 %v69, %v77
    %v94 = vmul.f32 %v69, %v78
    %v95 = vmul.f32 %v74, %v77
    %v96 = vmul.f32 %v74, %v78
    %v97 = vld [vmem:[%s2] sm:$0xff]
    %v98 = vld [vmem:[%s2 + $0x8] sm:$0xff]
    %v99 = vld [vmem:[%s2 + $0x10] sm:$0xff]
    %v100 = vld [vmem:[%s2 + $0x18] sm:$0xff]
    %v101 = vld [vmem:[%s2 + $0x20] sm:$0xff]
    %v102 = vld [vmem:[%s2 + $0x28] sm:$0xff]
    %v103 = vld [vmem:[%s2 + $0x30] sm:$0xff]
    %v104 = vld [vmem:[%s2 + $0x38] sm:$0xff]
    %106 = vset.pattern.permute.xlu0 0
    %107 = vperm.xlu0 %106, %v97
    %v108 = vpop.permute.xlu0 %107
    %111 = vset.pattern.permute.xlu0 0
    %112 = vperm.xlu0 %111, %v98
    %v113 = vpop.permute.xlu0 %112
    %116 = vset.pattern.permute.xlu0 0
    %117 = vperm.xlu0 %116, %v99
    %v118 = vpop.permute.xlu0 %117
    %121 = vset.pattern.permute.xlu0 0
    %122 = vperm.xlu0 %121, %v100
    %v123 = vpop.permute.xlu0 %122
    %126 = vset.pattern.permute.xlu0 0
    %127 = vperm.xlu0 %126, %v101
    %v128 = vpop.permute.xlu0 %127
    %131 = vset.pattern.permute.xlu0 0
    %132 = vperm.xlu0 %131, %v102
    %v133 = vpop.permute.xlu0 %132
    %136 = vset.pattern.permute.xlu0 0
    %137 = vperm.xlu0 %136, %v103
    %v138 = vpop.permute.xlu0 %137
    %141 = vset.pattern.permute.xlu0 0
    %142 = vperm.xlu0 %141, %v104
    %v143 = vpop.permute.xlu0 %142
    %v145 = vadd.f32 %v81, %v108
    %v146 = vadd.f32 %v82, %v108
    %v147 = vadd.f32 %v83, %v113
    %v148 = vadd.f32 %v84, %v113
    %v149 = vadd.f32 %v85, %v118
    %v150 = vadd.f32 %v86, %v118
    %v151 = vadd.f32 %v87, %v123
    %v152 = vadd.f32 %v88, %v123
    %v153 = vadd.f32 %v89, %v128
    %v154 = vadd.f32 %v90, %v128
    %v155 = vadd.f32 %v91, %v133
    %v156 = vadd.f32 %v92, %v133
    %v157 = vadd.f32 %v93, %v138
    %v158 = vadd.f32 %v94, %v138
    %v159 = vadd.f32 %v95, %v143
    %v160 = vadd.f32 %v96, %v143
    %v161 = vmax.f32 %v145, 0.0
    %v162 = vmax.f32 %v146, 0.0
    %v163 = vmax.f32 %v147, 0.0
    %v164 = vmax.f32 %v148, 0.0
    %v165 = vmax.f32 %v149, 0.0
    %v166 = vmax.f32 %v150, 0.0
    %v167 = vmax.f32 %v151, 0.0
    %v168 = vmax.f32 %v152, 0.0
    %v169 = vmax.f32 %v153, 0.0
    %v170 = vmax.f32 %v154, 0.0
    %v171 = vmax.f32 %v155, 0.0
    %v172 = vmax.f32 %v156, 0.0
    %v173 = vmax.f32 %v157, 0.0
    %v174 = vmax.f32 %v158, 0.0
    %v175 = vmax.f32 %v159, 0.0
    %v176 = vmax.f32 %v160, 0.0
    %v177 = vld [vmem:[%s3] sm:$0xff]
    %v178 = vld [vmem:[%s3 + $0x8] sm:$0xff]
    %v179 = vld [vmem:[%s3 + $0x10] sm:$0xff]
    %v180 = vld [vmem:[%s3 + $0x18] sm:$0xff]
    %v181 = vld [vmem:[%s4] sm:$0xff]
    %v182 = vld [vmem:[%s4 + $0x8] sm:$0xff]
    %v183 = vld [vmem:[%s4 + $0x10] sm:$0xff]
    %v184 = vld [vmem:[%s4 + $0x18] sm:$0xff]
    %186 = vset.pattern.permute.xlu0 0
    %187 = vperm.xlu0 %186, %v181
    %v188 = vpop.permute.xlu0 %187
    %191 = vset.pattern.permute.xlu0 0
    %192 = vperm.xlu0 %191, %v182
    %v193 = vpop.permute.xlu0 %192
    %196 = vset.pattern.permute.xlu0 0
    %197 = vperm.xlu0 %196, %v183
    %v198 = vpop.permute.xlu0 %197
    %201 = vset.pattern.permute.xlu0 0
    %202 = vperm.xlu0 %201, %v184
    %v203 = vpop.permute.xlu0 %202
    %vm205 = vcmask 523264
    %v207 = vsel %vm205, %v177, 0
    %v210 = vsel %vm205, %v178, 0
    %v213 = vsel %vm205, %v179, 0
    %v216 = vsel %vm205, %v180, 0
    %218 = vmatpush.msra.mxu0 0.0
    %219 = vmatpush.msra.mxu0 0.0
    %220 = vmatpush.msra.mxu0 0.0
    %221 = vmatpush.msra.mxu0 0.0
    %222 = vmatpush.msra.mxu0 0.0
    %223 = vmatpush.msra.mxu0 0.0
    %224 = vmatpush.msra.mxu0 0.0
    %225 = vmatpush.msra.mxu0 0.0
    %226 = vmatpush.msra.mxu0 %v175
    %227 = vmatpush.msra.mxu0 %v173
    %228 = vmatpush.msra.mxu0 %v171
    %229 = vmatpush.msra.mxu0 %v169
    %230 = vmatpush.msra.mxu0 %v167
    %231 = vmatpush.msra.mxu0 %v165
    %232 = vmatpush.msra.mxu0 %v163
    %233 = vmatpush.msra.mxu0 %v161
    %234 = vmatmul.f32.gmra.mxu0 %v207
    %v235 = vpop.f32.mrf.mxu0
    %v236 = vadd.f32 %v188, %v235
    %237 = vmatmul.f32.gmra.mxu0 %v210
    %v238 = vpop.f32.mrf.mxu0
    %v239 = vadd.f32 %v193, %v238
    %240 = vmatmul.f32.gmra.mxu0 %v213
    %v241 = vpop.f32.mrf.mxu0
    %v242 = vadd.f32 %v198, %v241
    %243 = vmatmul.f32.gmra.mxu0 %v216
    %v244 = vpop.f32.mrf.mxu0
    %v245 = vadd.f32 %v203, %v244
    %246 = vdwg.mxu0
    %247 = vmatpush.msra.mxu0 0.0
    %248 = vmatpush.msra.mxu0 0.0
    %249 = vmatpush.msra.mxu0 0.0
    %250 = vmatpush.msra.mxu0 0.0
    %251 = vmatpush.msra.mxu0 0.0
    %252 = vmatpush.msra.mxu0 0.0
    %253 = vmatpush.msra.mxu0 0.0
    %254 = vmatpush.msra.mxu0 0.0
    %255 = vmatpush.msra.mxu0 %v176
    %256 = vmatpush.msra.mxu0 %v174
    %257 = vmatpush.msra.mxu0 %v172
    %258 = vmatpush.msra.mxu0 %v170
    %259 = vmatpush.msra.mxu0 %v168
    %260 = vmatpush.msra.mxu0 %v166
    %261 = vmatpush.msra.mxu0 %v164
    %262 = vmatpush.msra.mxu0 %v162
    %263 = vmatmul.f32.gmra.mxu0 %v207
    %v264 = vpop.f32.mrf.mxu0
    %v265 = vadd.f32 %v188, %v264
    %266 = vmatmul.f32.gmra.mxu0 %v210
    %v267 = vpop.f32.mrf.mxu0
    %v268 = vadd.f32 %v193, %v267
    %269 = vmatmul.f32.gmra.mxu0 %v213
    %v270 = vpop.f32.mrf.mxu0
    %v271 = vadd.f32 %v198, %v270
    %272 = vmatmul.f32.gmra.mxu0 %v216
    %v273 = vpop.f32.mrf.mxu0
    %v274 = vadd.f32 %v203, %v273
    %275 = vdwg.mxu0
    %v276 = vmax.f32 %v236, 0.0
    %v277 = vmax.f32 %v265, 0.0
    %v278 = vmax.f32 %v239, 0.0
    %v279 = vmax.f32 %v268, 0.0
    %v280 = vmax.f32 %v242, 0.0
    %v281 = vmax.f32 %v271, 0.0
    %v282 = vmax.f32 %v245, 0.0
    %v283 = vmax.f32 %v274, 0.0
    %v284 = vld [vmem:[%s5] sm:$0x3]
    %v285 = vld [vmem:[%s6] sm:$0x3]
    %287 = vset.pattern.permute.xlu0 0
    %288 = vperm.xlu0 %287, %v285
    %v289 = vpop.permute.xlu0 %288
    %vm291 = vcmask 261120
    %v293 = vsel %vm291, %v284, 0
    %295 = vmatpush.msra.mxu0 0.0
    %296 = vmatpush.msra.mxu0 0.0
    %297 = vmatpush.msra.mxu0 0.0
    %298 = vmatpush.msra.mxu0 0.0
    %299 = vmatpush.msra.mxu0 0.0
    %300 = vmatpush.msra.mxu0 0.0
    %301 = vmatpush.msra.mxu0 0.0
    %302 = vmatpush.msra.mxu0 0.0
    %303 = vmatpush.msra.mxu0 0.0
    %304 = vmatpush.msra.mxu0 0.0
    %305 = vmatpush.msra.mxu0 0.0
    %306 = vmatpush.msra.mxu0 0.0
    %307 = vmatpush.msra.mxu0 %v282
    %308 = vmatpush.msra.mxu0 %v280
    %309 = vmatpush.msra.mxu0 %v278
    %310 = vmatpush.msra.mxu0 %v276
    %311 = vmatmul.f32.gmra.mxu0 %v293
    %v312 = vpop.f32.mrf.mxu0
    %v313 = vadd.f32 %v289, %v312
    %314 = vdwg.mxu0
    %315 = vmatpush.msra.mxu0 0.0
    %316 = vmatpush.msra.mxu0 0.0
    %317 = vmatpush.msra.mxu0 0.0
    %318 = vmatpush.msra.mxu0 0.0
    %319 = vmatpush.msra.mxu0 0.0
    %320 = vmatpush.msra.mxu0 0.0
    %321 = vmatpush.msra.mxu0 0.0
    %322 = vmatpush.msra.mxu0 0.0
    %323 = vmatpush.msra.mxu0 0.0
    %324 = vmatpush.msra.mxu0 0.0
    %325 = vmatpush.msra.mxu0 0.0
    %326 = vmatpush.msra.mxu0 0.0
    %327 = vmatpush.msra.mxu0 %v283
    %328 = vmatpush.msra.mxu0 %v281
    %329 = vmatpush.msra.mxu0 %v279
    %330 = vmatpush.msra.mxu0 %v277
    %331 = vmatmul.f32.gmra.mxu0 %v293
    %v332 = vpop.f32.mrf.mxu0
    %v333 = vadd.f32 %v289, %v332
    %334 = vdwg.mxu0
    %v337 = vrot.slane %v333, 6
    %vm338 = vcmask 1041408
    %v339 = vsel %vm338, %v313, %v337
    %341 = vst [vmem:[#allocation2] sm:$0xf] %v339
    // Predicated region
    $region30: #{tpu_custom_call.1} parent=1 // pred_check
      _
    $region31: #{tpu_custom_call.1} parent=1 // pred_check_branch
      %343 = sbr.rel (0) target = $region33
    $region32: #{tpu_custom_call.1} parent=1 // pred_region
      %345 = vsyncadd [#allocation3], 0
      %s347 = sshll.u32 [#allocation2], 4
      %s348 = int_to_ptr.vmem [resolvable:$true] %s347
      %s349 = sshll.u32 %s7, 4
      %s350 = int_to_ptr.hbm [resolvable:$true] %s349
      %352 = dma.vmem_to_hbm [thread:$0]  %s348, 64, %s350, [#allocation3]
    $region33: #{tpu_custom_call.1} parent=1 // pred_fallthru
      _
    // Predicated region
    $region34: #{tpu_custom_call.1} parent=1 // pred_check
      _
    $region35: #{tpu_custom_call.1} parent=1 // pred_check_branch
      %354 = sbr.rel (0) target = $region37
    $region36: #{tpu_custom_call.1} parent=1 // pred_region
      %356 = dma.done [#allocation3], 64
    $region37: #{tpu_custom_call.1} parent=1 // pred_fallthru
      _
    %357 = vsyncpa [#allocation3], 1

</llo_original>
